<compile_context>
chip_gen: v7x
topology: tpu7x:2x2x1
jax: 0.10.0
libtpu: 0.0.40
codegen_flags: <defaults>
</compile_context>

<pallas_src>
import functools

import jax
import jax.numpy as jnp
from jax.experimental import pallas as pl
from jax.experimental.pallas import tpu as pltpu


# ----------------------------------------------------------------------------
# Single fused kernel: gate MLP + softmax + packed FiLM matmuls, with the big
# weight DMA overlapped with the gate path.
# ----------------------------------------------------------------------------
def _make_kernel(Z, H, D, TOTAL, TOTAL_PAD):
    DZ = D * Z
    ROW_W2 = ((Z + 1 + 7) // 8) * 8     # sublane-aligned start of w2e in the packed MLP array

    def kernel(x_ref, wmlp_ref, wbias_ref, wzw_hbm, out_ref, wzw_vmem, sem):
        # (1) kick off the big bf16 FiLM-weight DMA immediately; it overlaps the
        #     entire gate MLP / softmax / zw construction below.
        cp = pltpu.make_async_copy(wzw_hbm, wzw_vmem, sem)
        cp.start()

        # (2) shared gate MLP.  x_pack = [ tile(x, D) | x | 1 ]; b1/b2 are folded
        #     into the packed weights via the constant-1 column / the constant-1
        #     passthrough hidden unit (survives the ReLU).
        x_aug = x_ref[:, DZ:DZ + Z + 1]                         # (B, Z+1) = [x | 1]
        w1e = wmlp_ref[0:Z + 1, 0:H + 1]                        # (Z+1, H+1)
        h_aug = jnp.maximum(
            jnp.dot(x_aug, w1e, preferred_element_type=jnp.float32), 0.0)  # (B, H+1)
        w2e = wmlp_ref[ROW_W2:ROW_W2 + H + 1, 0:D]              # (H+1, D)
        logits = jnp.dot(h_aug, w2e, preferred_element_type=jnp.float32)   # (B, D)

        # (3) softmax in f32 with an exact divide (keeps the "+1 baked into the
        #     gamma bias rows" trick exact -- no approx reciprocal, no bf16 gate).
        mx = jnp.max(logits, axis=1, keepdims=True)
        ex = jnp.exp(logits - mx)
        gate = ex / jnp.sum(ex, axis=1, keepdims=True)          # (B, D) f32

        # (4) zw = gate (x) x without the (B,D,Z)->(B,D*Z) sublane->lane relayout:
        #     expand gate to lane-dense (B, D*Z) via a tiny MXU pass against a
        #     block one-hot, then one VPU multiply with the pre-tiled x.
        d_idx = jax.lax.broadcasted_iota(jnp.int32, (D, DZ), 0)
        c_idx = jax.lax.broadcasted_iota(jnp.int32, (D, DZ), 1)
        lo = d_idx * Z
        expand = jnp.logical_and(c_idx >= lo, c_idx < lo + Z).astype(jnp.float32)
        gate_exp = jnp.dot(gate, expand, preferred_element_type=jnp.float32)  # (B, DZ)
        zw = x_ref[:, 0:DZ] * gate_exp                          # (B, DZ) lane-dense

        # (5) domain-mixture bias term in f32 (K = 8, negligible; keeps the baked
        #     "+1" on gamma slots exact).
        film = jnp.dot(gate, wbias_ref[...], preferred_element_type=jnp.float32)

        # (6) the big FiLM matmul: K = D*Z = 256 (one MXU K-pass on v6e/v7x),
        #     bf16 weights from the overlapped DMA, f32 accumulate.
        cp.wait()
        film = film + jnp.dot(zw.astype(jnp.bfloat16), wzw_vmem[...],
                              preferred_element_type=jnp.float32)

        # (7) one lane-dense output slab; gate_logits ride in the otherwise-zero
        #     padded lanes [TOTAL, TOTAL+D) (weight columns there MUST stay zero)
        #     and are sliced back out in the wrapper.
        out_ref[...] = film
        out_ref[:, TOTAL:TOTAL + D] = logits

    return kernel


def _fused_forward(x, w_mlp, w_bias, w_zw, *, Z, H, D, TOTAL, TOTAL_PAD):
    B = x.shape[0]
    DZ = D * Z
    # Tiny wrapper-side prep (a couple of KiB): one lane-dense packed activation
    # [ tile(x, D) | x | 1 ] so the kernel needs no tile / concat / relayout.
    x_pack = jnp.concatenate(
        [jnp.tile(x, (1, D)), x, jnp.ones((B, 1), x.dtype)], axis=1)   # (B, D*Z+Z+1)

    kernel = _make_kernel(Z, H, D, TOTAL, TOTAL_PAD)
    vmem = pl.BlockSpec(memory_space=pltpu.MemorySpace.VMEM)
    out = pl.pallas_call(
        kernel,
        out_shape=jax.ShapeDtypeStruct((B, TOTAL_PAD), jnp.float32),
        in_specs=[vmem, vmem, vmem, pl.BlockSpec(memory_space=pl.ANY)],
        out_specs=vmem,
        scratch_shapes=[pltpu.VMEM((DZ, TOTAL_PAD), jnp.bfloat16),
                        pltpu.SemaphoreType.DMA],
    )(x_pack, w_mlp, w_bias, w_zw)
    gate_logits = out[:, TOTAL:TOTAL + D]
    film = out[:, :TOTAL]
    return gate_logits, film


# ----------------------------------------------------------------------------
# Module wrapper: parameter setup, weight packing, output slicing.
# ----------------------------------------------------------------------------
class MultiDomainFilmAdaptationNetworkPallas:
    def __init__(self, num_maps_per_layer, num_blocks_per_layer, z_g_dim, key,
                 num_domains=8):
        self.num_maps = list(num_maps_per_layer)
        self.num_blocks = list(num_blocks_per_layer)
        self.num_target_layers = len(self.num_maps)
        self.z_g_dim = z_g_dim
        self.num_domains = num_domains

        keys = jax.random.split(key, 4 + self.num_target_layers)
        h = self.num_maps[0]
        s1 = 1.0 / float(jnp.sqrt(z_g_dim))
        s2 = 1.0 / float(jnp.sqrt(h))
        # shared_layer = Linear(z_g_dim, num_maps[0]) -> ReLU -> Linear(num_maps[0], 8)
        self.w1 = jax.random.uniform(keys[0], (z_g_dim, h), jnp.float32, -s1, s1)
        self.b1 = jax.random.uniform(keys[1], (1, h), jnp.float32, -s1, s1)
        self.w2 = jax.random.uniform(keys[2], (h, num_domains), jnp.float32, -s2, s2)
        self.b2 = jax.random.uniform(keys[3], (1, num_domains), jnp.float32, -s2, s2)

        # raw per-layer FiLM generator params (kept for the reference check);
        # 4 param slots per residual block: gamma1, beta1, gamma2, beta2.
        self.raw_layer_params = []
        for i, (m, nb) in enumerate(zip(self.num_maps, self.num_blocks)):
            kw, kb = jax.random.split(keys[4 + i])
            P = nb * 4
            w = jax.random.uniform(kw, (P, num_domains * z_g_dim, m),
                                   jnp.float32, -s1, s1)
            b = 0.01 * jax.random.uniform(kb, (P, num_domains, m),
                                          jnp.float32, -1.0, 1.0)
            self.raw_layer_params.append((w, b))

        D, Z, H = num_domains, z_g_dim, h
        self.hidden = H

        # ---- pack the gate MLP into ONE small array; b1/b2 folded in via the
        #      constant-1 column of x_pack / a constant-1 passthrough hidden unit.
        w1e = jnp.zeros((Z + 1, H + 1), jnp.float32)
        w1e = w1e.at[:Z, :H].set(self.w1)
        w1e = w1e.at[Z, :H].set(self.b1[0])
        w1e = w1e.at[Z, H].set(1.0)                        # passthrough "1" (survives ReLU)
        w2e = jnp.concatenate([self.w2, self.b2], axis=0)  # (H+1, D)
        row_w2 = ((Z + 1 + 7) // 8) * 8                    # sublane-aligned start for w2e
        width = max(H + 1, D)
        w_mlp = jnp.zeros((row_w2 + H + 1, width), jnp.float32)
        w_mlp = w_mlp.at[:Z + 1, :H + 1].set(w1e)
        w_mlp = w_mlp.at[row_w2:, :D].set(w2e)
        self.w_mlp = w_mlp

        # ---- pack every layer's FiLM generator into two matrices:
        #      W_zw  : (D*Z, total_pad)  bf16  (dominant HBM transfer, halved)
        #      W_bias: (D,   total_pad)  f32   ("+1" baked into gamma slots; exact)
        blocks_w, blocks_b = [], []
        for (w, b) in self.raw_layer_params:
            P, _, m = w.shape
            # gamma slots (gamma1/gamma2) are the even slot indices; softmax gate
            # sums to 1, so adding 1.0 to all D bias rows folds the "+1" in.
            gamma = (jnp.arange(P) % 2 == 0).astype(jnp.float32)
            b_plus = b + gamma[:, None, None]
            blocks_w.append(jnp.transpose(w, (1, 0, 2)).reshape(D * Z, P * m))
            blocks_b.append(jnp.transpose(b_plus, (1, 0, 2)).reshape(D, P * m))
        w_zw = jnp.concatenate(blocks_w, axis=1)       # (D*Z, 960)
        w_bias = jnp.concatenate(blocks_b, axis=1)     # (D,   960)
        self.total = w_zw.shape[1]
        # pad so gate_logits (D lanes) also fit in the zero lanes of the slab
        self.total_pad = ((self.total + D + 127) // 128) * 128
        pad = self.total_pad - self.total
        # INVARIANT: padded columns [total, total_pad) of BOTH weight matrices
        # must stay zero -- the kernel writes gate_logits into [total, total+D).
        self.w_zw = jnp.pad(w_zw, ((0, 0), (0, pad))).astype(jnp.bfloat16)
        self.w_bias = jnp.pad(w_bias, ((0, 0), (0, pad)))

        self._forward = jax.jit(functools.partial(
            _fused_forward, Z=Z, H=H, D=D,
            TOTAL=self.total, TOTAL_PAD=self.total_pad))

    def forward_slab(self, x):
        """Lane-dense forward: (film_slab (B, total), gate_logits (B, D)).

        Preferred for downstream consumers that can use static column offsets --
        avoids materializing dozens of sub-128-lane slices."""
        gate_logits, film = self._forward(x, self.w_mlp, self.w_bias, self.w_zw)
        return film, gate_logits

    def __call__(self, x, mode='train'):
        # TODO(synk): 'test'-mode alpha bookkeeping of the injected FilmLayerNetwork omitted.
        film, gate_logits = self.forward_slab(x)
        # Split the slab into per-layer / per-block FiLM dicts (original API).
        all_layer_params = []
        off = 0
        for m, nb in zip(self.num_maps, self.num_blocks):
            block_params = []
            for blk in range(nb):
                base = off + blk * 4 * m
                block_params.append({
                    'gamma1': film[:, base + 0 * m:base + 1 * m],  # +1 already baked in
                    'beta1':  film[:, base + 1 * m:base + 2 * m],
                    'gamma2': film[:, base + 2 * m:base + 3 * m],  # +1 already baked in
                    'beta2':  film[:, base + 3 * m:base + 4 * m],
                })
            all_layer_params.append(block_params)
            off += nb * 4 * m
        return all_layer_params, gate_logits


# ----------------------------------------------------------------------------
# Pure-JAX reference (independent of the weight packing) for sanity checks.
# ----------------------------------------------------------------------------
def _ref_forward(net, x):
    h = jnp.maximum(x @ net.w1 + net.b1, 0.0)
    logits = h @ net.w2 + net.b2
    gate = jax.nn.softmax(logits, axis=1)
    zw = (gate[:, :, None] * x[:, None, :]).reshape(x.shape[0], -1)
    raws = []
    for w, b in net.raw_layer_params:
        raws.append(jnp.einsum('bk,pkm->pbm', zw, w)
                    + jnp.einsum('bd,pdm->pbm', gate, b))
    return logits, gate, raws


if __name__ == "__main__":
    key = jax.random.PRNGKey(0)
    kparam, kx = jax.random.split(key)

    batch = 2
    z_g_dim = 32
    num_maps_per_layer = [8, 16, 32, 64]
    num_blocks_per_layer = [2, 2, 2, 2]

    net = MultiDomainFilmAdaptationNetworkPallas(
        num_maps_per_layer, num_blocks_per_layer, z_g_dim, kparam)
    x = jax.random.normal(kx, (batch, z_g_dim), jnp.float32)

    params, gate_logits = net(x, mode='train')
    gate_logits = jax.block_until_ready(gate_logits)
    for layer in params:
        for blk in layer:
            for v in blk.values():
                jax.block_until_ready(v)

    # sanity check against the pure-JAX f32 reference.
    # gate path is f32 end-to-end -> tight tolerance; the FiLM z-term uses bf16
    # weights -> ~1e-2 tolerance (the "+1" on gamma stays exact via the f32 bias).
    ref_logits, ref_gate, ref_raws = _ref_forward(net, x)
    assert jnp.allclose(gate_logits, ref_logits, atol=1e-4, rtol=1e-4)
    for li, (layer, raw) in enumerate(zip(params, ref_raws)):
        nb = num_blocks_per_layer[li]
        raw = raw.reshape(nb, 4, batch, num_maps_per_layer[li])
        for blk in range(nb):
            assert jnp.allclose(layer[blk]['gamma1'], raw[blk, 0] + 1.0, atol=3e-2, rtol=3e-2)
            assert jnp.allclose(layer[blk]['beta1'],  raw[blk, 1],       atol=3e-2, rtol=3e-2)
            assert jnp.allclose(layer[blk]['gamma2'], raw[blk, 2] + 1.0, atol=3e-2, rtol=3e-2)
            assert jnp.allclose(layer[blk]['beta2'],  raw[blk, 3],       atol=3e-2, rtol=3e-2)

    print("KERNEL_OK")
</pallas_src>

<mosaic_0001>
module attributes {stable_mosaic.version = 11 : i64} {
  func.func @kernel(%arg0: memref<2x289xf32, #tpu.memory_space<vmem>>, %arg1: memref<49x9xf32, #tpu.memory_space<vmem>>, %arg2: memref<8x1024xf32, #tpu.memory_space<vmem>>, %arg3: memref<256x1024xbf16, #tpu.memory_space<any>>, %arg4: memref<2x1024xf32, #tpu.memory_space<vmem>>, %arg5: memref<256x1024xbf16, #tpu.memory_space<vmem>>, %arg6: memref<!tpu.dma_semaphore, #tpu.memory_space<semaphore_mem>>) attributes {dimension_semantics = [], scalar_prefetch = 0 : i64, scratch_operands = 2 : i64, tpu.core_type = #tpu.core_type<tc>} {
    tpu.enqueue_dma source(%arg3 : memref<256x1024xbf16, #tpu.memory_space<any>>) target(%arg5 : memref<256x1024xbf16, #tpu.memory_space<vmem>>) target_semaphore(%arg6 : memref<!tpu.dma_semaphore, #tpu.memory_space<semaphore_mem>>)
    %c0 = arith.constant 0 : index
    %c256 = arith.constant 256 : index
    %0 = vector.load %arg0[%c0, %c256] : memref<2x289xf32, #tpu.memory_space<vmem>>, vector<2x33xf32>
    %c0_0 = arith.constant 0 : index
    %c0_1 = arith.constant 0 : index
    %1 = vector.load %arg1[%c0_0, %c0_1] : memref<49x9xf32, #tpu.memory_space<vmem>>, vector<33x9xf32>
    %cst = arith.constant dense<0.000000e+00> : vector<2x9xf32>
    %2 = tpu.matmul %0, %1, %cst {dimension_numbers = #tpu.dot_dimension_numbers<[1], [0], [0], [1], [0, 0, 1, 1], [], []>} : vector<2x33xf32>, vector<33x9xf32>, vector<2x9xf32> -> vector<2x9xf32>
    %cst_2 = arith.constant 0.000000e+00 : f32
    %3 = vector.broadcast %cst_2 : f32 to vector<2x9xf32>
    %4 = arith.maximumf %2, %3 : vector<2x9xf32>
    %c40 = arith.constant 40 : index
    %c0_3 = arith.constant 0 : index
    %5 = vector.load %arg1[%c40, %c0_3] : memref<49x9xf32, #tpu.memory_space<vmem>>, vector<9x8xf32>
    %cst_4 = arith.constant dense<0.000000e+00> : vector<2x8xf32>
    %6 = tpu.matmul %4, %5, %cst_4 {dimension_numbers = #tpu.dot_dimension_numbers<[1], [0], [0], [1], [0, 0, 1, 1], [], []>} : vector<2x9xf32>, vector<9x8xf32>, vector<2x8xf32> -> vector<2x8xf32>
    %cst_5 = arith.constant dense<0xFF800000> : vector<2xf32>
    %7 = vector.multi_reduction <maximumf>, %6, %cst_5 [1] : vector<2x8xf32> to vector<2xf32>
    %8 = vector.shape_cast %7 : vector<2xf32> to vector<2x1xf32>
    %9 = vector.broadcast %8 : vector<2x1xf32> to vector<2x8xf32>
    %10 = arith.subf %6, %9 : vector<2x8xf32>
    %11 = math.exp %10 : vector<2x8xf32>
    %cst_6 = arith.constant dense<0.000000e+00> : vector<2xf32>
    %12 = vector.multi_reduction <add>, %11, %cst_6 [1] : vector<2x8xf32> to vector<2xf32>
    %13 = vector.shape_cast %12 : vector<2xf32> to vector<2x1xf32>
    %14 = vector.broadcast %13 : vector<2x1xf32> to vector<2x8xf32>
    %15 = arith.divf %11, %14 : vector<2x8xf32>
    %16 = tpu.iota {dimensions = array<i32: 0>} : vector<8x256xi32>
    %17 = tpu.iota {dimensions = array<i32: 1>} : vector<8x256xi32>
    %c32_i32 = arith.constant 32 : i32
    %18 = vector.broadcast %c32_i32 : i32 to vector<8x256xi32>
    %19 = arith.muli %16, %18 : vector<8x256xi32>
    %20 = arith.cmpi sge, %17, %19 : vector<8x256xi32>
    %c32_i32_7 = arith.constant 32 : i32
    %21 = vector.broadcast %c32_i32_7 : i32 to vector<8x256xi32>
    %22 = arith.addi %19, %21 : vector<8x256xi32>
    %23 = arith.cmpi slt, %17, %22 : vector<8x256xi32>
    %24 = arith.andi %20, %23 : vector<8x256xi1>
    %25 = arith.extui %24 : vector<8x256xi1> to vector<8x256xi32>
    %26 = arith.sitofp %25 : vector<8x256xi32> to vector<8x256xf32>
    %cst_8 = arith.constant dense<0.000000e+00> : vector<2x256xf32>
    %27 = tpu.matmul %15, %26, %cst_8 {dimension_numbers = #tpu.dot_dimension_numbers<[1], [0], [0], [1], [0, 0, 1, 1], [], []>} : vector<2x8xf32>, vector<8x256xf32>, vector<2x256xf32> -> vector<2x256xf32>
    %c0_9 = arith.constant 0 : index
    %c0_10 = arith.constant 0 : index
    %28 = vector.load %arg0[%c0_9, %c0_10] : memref<2x289xf32, #tpu.memory_space<vmem>>, vector<2x256xf32>
    %29 = arith.mulf %28, %27 : vector<2x256xf32>
    %c0_11 = arith.constant 0 : index
    %c0_12 = arith.constant 0 : index
    %30 = vector.load %arg2[%c0_11, %c0_12] : memref<8x1024xf32, #tpu.memory_space<vmem>>, vector<8x1024xf32>
    %cst_13 = arith.constant dense<0.000000e+00> : vector<2x1024xf32>
    %31 = tpu.matmul %15, %30, %cst_13 {dimension_numbers = #tpu.dot_dimension_numbers<[1], [0], [0], [1], [0, 0, 1, 1], [], []>} : vector<2x8xf32>, vector<8x1024xf32>, vector<2x1024xf32> -> vector<2x1024xf32>
    tpu.wait_dma2 semaphore(%arg6 : memref<!tpu.dma_semaphore, #tpu.memory_space<semaphore_mem>>) src(%arg3 : memref<256x1024xbf16, #tpu.memory_space<any>>) dst(%arg5 : memref<256x1024xbf16, #tpu.memory_space<vmem>>)
    %32 = arith.truncf %29 : vector<2x256xf32> to vector<2x256xbf16>
    %c0_14 = arith.constant 0 : index
    %c0_15 = arith.constant 0 : index
    %33 = vector.load %arg5[%c0_14, %c0_15] : memref<256x1024xbf16, #tpu.memory_space<vmem>>, vector<256x1024xbf16>
    %cst_16 = arith.constant dense<0.000000e+00> : vector<2x1024xf32>
    %34 = tpu.matmul %32, %33, %cst_16 {dimension_numbers = #tpu.dot_dimension_numbers<[1], [0], [0], [1], [0, 0, 1, 1], [], []>} : vector<2x256xbf16>, vector<256x1024xbf16>, vector<2x1024xf32> -> vector<2x1024xf32>
    %35 = arith.addf %31, %34 : vector<2x1024xf32>
    %c0_17 = arith.constant 0 : index
    %c0_18 = arith.constant 0 : index
    %36 = vector.load %arg4[%c0_17, %c0_18] : memref<2x1024xf32, #tpu.memory_space<vmem>>, vector<2x1024xf32>
    tpu.vector_store %arg4[%c0_17, %c0_18], %35 {strides = array<i32>} : memref<2x1024xf32, #tpu.memory_space<vmem>>, vector<2x1024xf32>,
    %c0_19 = arith.constant 0 : index
    %c960 = arith.constant 960 : index
    %37 = vector.load %arg4[%c0_19, %c960] : memref<2x1024xf32, #tpu.memory_space<vmem>>, vector<2x8xf32>
    tpu.vector_store %arg4[%c0_19, %c960], %6 {strides = array<i32>} : memref<2x1024xf32, #tpu.memory_space<vmem>>, vector<2x8xf32>,
    return
  }
}

</mosaic_0001>

<llo_original>
// kernel: tile.9
$region0: #{tile.9}
  %s0 = inlined_call_operand.vmem [shape: f32[2,8,32], index: 0, kind: input, shape index: {}]
  %s1 = inlined_call_operand.vmem [shape: f32[2,256], index: 1, kind: output, shape index: {}]
  $region1: #{tile.9} parent=0
    #allocation0 [shape = 'u8[8192]{0}', space=vmem, size = 0x2000, scoped, tag = 'scoped mem for output reshape']
    %v2 = vld [vmem:[%s0] ss:$4 sm:$0xf]
    %vm3 = vcmask 261120
    %4 = vst.msk [vmem:[#allocation0] ss:$8 sm:$0x3] %vm3, %v2
    %s5 = scalar_lea.vmem [#allocation0], 4294967281
    %6 = vst.msk [vmem:[%s5] ss:$8 sm:$0xc] %vm3, %v2
    %s7 = scalar_lea.vmem %s0, 3
    %v8 = vld.sshfl [vmem:[%s7] sm:$0xff pattern:$0xccccc480]
    %9 = vrot.lane.b32.xlu0 %v8, 96
    %v10 = vpop.permute.xlu0 %9
    %vm11 = vcmask 1048320
    %12 = vst.msk [vmem:[#allocation0] sm:$0x3] %vm11, %v10
    %s13 = scalar_lea.vmem [#allocation0], 6
    %14 = vst.msk [vmem:[%s13] sm:$0xc] %vm11, %v10
    %s15 = scalar_lea.vmem %s0, 2
    %v16 = vld.sshfl [vmem:[%s15] sm:$0xff pattern:$0xccccc480]
    %17 = vrot.lane.b32.xlu0 %v16, 64
    %v18 = vpop.permute.xlu0 %17
    %vm19 = vcmask 785920
    %20 = vst.msk [vmem:[#allocation0] sm:$0x3] %vm19, %v18
    %s21 = scalar_lea.vmem [#allocation0], 6
    %22 = vst.msk [vmem:[%s21] sm:$0xc] %vm19, %v18
    %s23 = scalar_lea.vmem %s0, 1
    %v24 = vld.sshfl [vmem:[%s23] sm:$0xff pattern:$0xccccc480]
    %25 = vrot.lane.b32.xlu0 %v24, 32
    %v26 = vpop.permute.xlu0 %25
    %vm27 = vcmask 523520
    %28 = vst.msk [vmem:[#allocation0] sm:$0x3] %vm27, %v26
    %s29 = scalar_lea.vmem [#allocation0], 6
    %30 = vst.msk [vmem:[%s29] sm:$0xc] %vm27, %v26
    %s32 = sshllo.u32 0, 2
    %v34 = vld [vmem:[#allocation0] sm:%s32]
    %s35 = sshllo.u32 0, 2
    %36 = vst [vmem:[%s1] sm:%s35] %v34
    %s37 = scalar_lea.vmem [#allocation0], 8
    %v38 = vld [vmem:[%s37] sm:%s32]
    %s39 = sshllo.u32 0, 2
    %s40 = scalar_lea.vmem %s1, 2
    %41 = vst [vmem:[%s40] sm:%s39] %v38

// kernel: _fused_forward.1
$region0: #{_fused_forward.1}
  #allocation0 [shape = 'u32[]', space=smem, size = 0x4, offset = 0x4, fixed_abs, tag = 'smem constant byte address 0x4 - core index']
  #allocation1 [shape = 'u32[144,128]{1,0:T(1,128)}', space=vmem, size = 0x12000, scoped, tag = 'internal scratch']
  #allocation2 [shape = 'bf16[256,1024]{1,0:T(16,128)(2,1)}', space=vmem, size = 0x80000, scoped, tag = 'scratch operand']
  #allocation3 [shape = 's32[1]{0}', space=sflag, size = 0x4, scoped, tag = 'scratch operand']
  #allocation4 [shape = 's32[]', space=sflag, size = 0x4, offset = 0, fixed_abs, tag = 'sflag constant byte address 0x0 - dummy sync flag']
  %s0 = inlined_call_operand.vmem [shape: f32[2,289], index: 0, kind: input, shape index: {}]
  %s1 = inlined_call_operand.vmem [shape: f32[49,9], index: 1, kind: input, shape index: {}]
  %s2 = inlined_call_operand.vmem [shape: f32[8,1024], index: 2, kind: input, shape index: {}]
  %s3 = inlined_call_operand.hbm [shape: bf16[256,1024], index: 3, kind: input, shape index: {}]
  %s4 = inlined_call_operand.vmem [shape: f32[2,1024], index: 4, kind: output, shape index: {}]
  %s5 = sld [smem:[#allocation0]]
  $region22: #{_fused_forward.1} parent=0
    _
  %s7 = ssub.s32 1, %s5
  %s8 = scalar_select 0, %s7, %s5
  $region1: #{_fused_forward.1} parent=0
    #allocation5 [shape = 'u32[9]{0}', space=smem, size = 0x24, scoped, tag = 'DMA stride descriptor']
    // Predicated region
    $region2: #{_fused_forward.1} parent=1 // pred_check
      _
    $region3: #{_fused_forward.1} parent=1 // pred_check_branch
      %10 = sbr.rel (0) target = $region5
    $region4: #{_fused_forward.1} parent=1 // pred_region
      _
    $region5: #{_fused_forward.1} parent=1 // pred_fallthru
      _
    // Predicated region
    $region6: #{_fused_forward.1} parent=1 // pred_check
      _
    $region7: #{_fused_forward.1} parent=1 // pred_check_branch
      %12 = sbr.rel (0) target = $region9
    $region8: #{_fused_forward.1} parent=1 // pred_region
      _
    $region9: #{_fused_forward.1} parent=1 // pred_fallthru
      _
    // Predicated region
    $region10: #{_fused_forward.1} parent=1 // pred_check
      _
    $region11: #{_fused_forward.1} parent=1 // pred_check_branch
      %14 = sbr.rel (0) target = $region13
    $region12: #{_fused_forward.1} parent=1 // pred_region
      _
    $region13: #{_fused_forward.1} parent=1 // pred_fallthru
      _
    %s16 = sshll.u32 1, 14
    %s17 = sxor.u32 4294967295, %s16
    %s19 = sld [smem:[#allocation0]]
    %s20 = sadd.s32 2, %s19
    %s22 = sshll.u32 7, 26
    %s23 = sxor.u32 4294967295, %s22
    %s24 = sand.u32 0, %s23
    %s25 = sshll.u32 %s20, 26
    %s26 = sor.u32 %s24, %s25
    %s27 = sshll.u32 [#allocation2], 4
    %s28 = int_to_ptr.vmem [resolvable:$true] %s27
    %31 = sst [smem:[#allocation5]] 1024
    %s32 = scalar_lea.smem [#allocation5], 1
    %33 = sst [smem:[%s32]] 1024
    %s34 = scalar_lea.smem [#allocation5], 2
    %35 = sst [smem:[%s34]] 8
    %s36 = scalar_lea.smem [#allocation5], 3
    %37 = sst [smem:[%s36]] 64
    %s38 = scalar_lea.smem [#allocation5], 4
    %39 = sst [smem:[%s38]] 128
    %s40 = scalar_lea.smem [#allocation5], 5
    %41 = sst [smem:[%s40]] 2
    %s42 = scalar_lea.smem [#allocation5], 6
    %43 = sst [smem:[%s42]] 512
    %s44 = scalar_lea.smem [#allocation5], 7
    %45 = sst [smem:[%s44]] 64
    %s46 = scalar_lea.smem [#allocation5], 8
    %47 = sst [smem:[%s46]] 4
    %49 = dma.general %s3, 16384, %s28, [#allocation3], [#allocation4], [#allocation5], %s26, 0
    %v50 = vld [vmem:[%s0 + $0x4] sm:$0x3]
    %v51 = vld [vmem:[%s1] sm:$0xff]
    %v52 = vld [vmem:[%s1 + $0x8] sm:$0xff]
    %v53 = vld [vmem:[%s1 + $0x10] sm:$0xff]
    %v54 = vld [vmem:[%s1 + $0x18] sm:$0xff]
    %v55 = vld [vmem:[%s1 + $0x20] sm:$0x1]
    %vm56 = vcmask 269312
    %v58 = vsel %vm56, %v50, 0
    %vm60 = vcmask 1040384
    %v62 = vsel %vm60, %v55, 0
    %64 = vmatprep.subr.mxu0 0.0
    %65 = vmatpush1.msra.mxu0 %v51
    %66 = vmatprep.subr.mxu0 0.0
    %67 = vmatpush1.msra.mxu0 %v52
    %68 = vmatprep.subr.mxu0 0.0
    %69 = vmatpush1.msra.mxu0 %v53
    %70 = vmatprep.subr.mxu0 0.0
    %71 = vmatpush1.msra.mxu0 %v54
    %72 = vmatprep.subr.mxu0 0.0
    %73 = vmatpush1.msra.mxu0 %v62
    %74 = vmatprep.subr.mxu0 0.0
    %75 = vmatpush1.msra.mxu0 0.0
    %76 = vmatprep.subr.mxu0 0.0
    %77 = vmatpush1.msra.mxu0 0.0
    %78 = vmatprep.subr.mxu0 0.0
    %79 = vmatpush1.msra.mxu0 0.0
    %80 = vmatprep.subr.mxu0 0.0
    %81 = vmatpush1.msra.mxu0 0.0
    %82 = vmatprep.subr.mxu0 0.0
    %83 = vmatpush1.msra.mxu0 0.0
    %84 = vmatprep.subr.mxu0 0.0
    %85 = vmatpush1.msra.mxu0 0.0
    %86 = vmatprep.subr.mxu0 0.0
    %87 = vmatpush1.msra.mxu0 0.0
    %88 = vmatprep.subr.mxu0 0.0
    %89 = vmatpush1.msra.mxu0 0.0
    %90 = vmatprep.subr.mxu0 0.0
    %91 = vmatpush1.msra.mxu0 0.0
    %92 = vmatprep.subr.mxu0 0.0
    %93 = vmatpush1.msra.mxu0 0.0
    %94 = vmatprep.subr.mxu0 0.0
    %95 = vmatpush1.msra.mxu0 0.0
    %96 = vmatprep.subr.mxu0 0.0
    %97 = vmatpush1.msra.mxu0 0.0
    %98 = vmatprep.subr.mxu0 0.0
    %99 = vmatpush1.msra.mxu0 0.0
    %100 = vmatprep.subr.mxu0 0.0
    %101 = vmatpush1.msra.mxu0 0.0
    %102 = vmatprep.subr.mxu0 0.0
    %103 = vmatpush1.msra.mxu0 0.0
    %104 = vmatprep.subr.mxu0 0.0
    %105 = vmatpush1.msra.mxu0 0.0
    %106 = vmatprep.subr.mxu0 0.0
    %107 = vmatpush1.msra.mxu0 0.0
    %108 = vmatprep.subr.mxu0 0.0
    %109 = vmatpush1.msra.mxu0 0.0
    %110 = vmatprep.subr.mxu0 0.0
    %111 = vmatpush1.msra.mxu0 0.0
    %112 = vmatprep.subr.mxu0 0.0
    %113 = vmatpush1.msra.mxu0 0.0
    %114 = vmatprep.subr.mxu0 0.0
    %115 = vmatpush1.msra.mxu0 0.0
    %116 = vmatprep.subr.mxu0 0.0
    %117 = vmatpush1.msra.mxu0 0.0
    %118 = vmatprep.subr.mxu0 0.0
    %119 = vmatpush1.msra.mxu0 0.0
    %120 = vmatprep.subr.mxu0 0.0
    %121 = vmatpush1.msra.mxu0 0.0
    %122 = vmatprep.subr.mxu0 0.0
    %123 = vmatpush1.msra.mxu0 0.0
    %124 = vmatprep.subr.mxu0 0.0
    %125 = vmatpush1.msra.mxu0 0.0
    %126 = vmatprep.subr.mxu0 0.0
    %127 = vmatpush1.msra.mxu0 0.0
    %128 = vmatprep.mubr.f32.mxu0 0.0
    %129 = vmatmul.mubr.f32.gmra.mrb[0].mxu0 %v58
    %v130 = vpop.f32.mrb[0].mxu0
    %v131 = vadd.f32 0.0, %v130
    %v132 = vpop.f32.mrb[0].mxu0
    %133 = vdwg.mxu0
    %v134 = vmax.f32 %v131, 0.0
    %v135 = vld [vmem:[%s1 + $0x28] sm:$0xff]
    %v136 = vld [vmem:[%s1 + $0x30] sm:$0x1]
    %vm137 = vcmask 72704
    %v139 = vsel %vm137, %v134, 0
    %v142 = vsel %vm60, %v136, 0
    %144 = vmatprep.subr.mxu0 0.0
    %145 = vmatpush1.msra.mxu0 %v135
    %146 = vmatprep.subr.mxu0 0.0
    %147 = vmatpush1.msra.mxu0 %v142
    %148 = vmatprep.subr.mxu0 0.0
    %149 = vmatpush1.msra.mxu0 0.0
    %150 = vmatprep.subr.mxu0 0.0
    %151 = vmatpush1.msra.mxu0 0.0
    %152 = vmatprep.subr.mxu0 0.0
    %153 = vmatpush1.msra.mxu0 0.0
    %154 = vmatprep.subr.mxu0 0.0
    %155 = vmatpush1.msra.mxu0 0.0
    %156 = vmatprep.subr.mxu0 0.0
    %157 = vmatpush1.msra.mxu0 0.0
    %158 = vmatprep.subr.mxu0 0.0
    %159 = vmatpush1.msra.mxu0 0.0
    %160 = vmatprep.subr.mxu0 0.0
    %161 = vmatpush1.msra.mxu0 0.0
    %162 = vmatprep.subr.mxu0 0.0
    %163 = vmatpush1.msra.mxu0 0.0
    %164 = vmatprep.subr.mxu0 0.0
    %165 = vmatpush1.msra.mxu0 0.0
    %166 = vmatprep.subr.mxu0 0.0
    %167 = vmatpush1.msra.mxu0 0.0
    %168 = vmatprep.subr.mxu0 0.0
    %169 = vmatpush1.msra.mxu0 0.0
    %170 = vmatprep.subr.mxu0 0.0
    %171 = vmatpush1.msra.mxu0 0.0
    %172 = vmatprep.subr.mxu0 0.0
    %173 = vmatpush1.msra.mxu0 0.0
    %174 = vmatprep.subr.mxu0 0.0
    %175 = vmatpush1.msra.mxu0 0.0
    %176 = vmatprep.subr.mxu0 0.0
    %177 = vmatpush1.msra.mxu0 0.0
    %178 = vmatprep.subr.mxu0 0.0
    %179 = vmatpush1.msra.mxu0 0.0
    %180 = vmatprep.subr.mxu0 0.0
    %181 = vmatpush1.msra.mxu0 0.0
    %182 = vmatprep.subr.mxu0 0.0
    %183 = vmatpush1.msra.mxu0 0.0
    %184 = vmatprep.subr.mxu0 0.0
    %185 = vmatpush1.msra.mxu0 0.0
    %186 = vmatprep.subr.mxu0 0.0
    %187 = vmatpush1.msra.mxu0 0.0
    %188 = vmatprep.subr.mxu0 0.0
    %189 = vmatpush1.msra.mxu0 0.0
    %190 = vmatprep.subr.mxu0 0.0
    %191 = vmatpush1.msra.mxu0 0.0
    %192 = vmatprep.subr.mxu0 0.0
    %193 = vmatpush1.msra.mxu0 0.0
    %194 = vmatprep.subr.mxu0 0.0
    %195 = vmatpush1.msra.mxu0 0.0
    %196 = vmatprep.subr.mxu0 0.0
    %197 = vmatpush1.msra.mxu0 0.0
    %198 = vmatprep.subr.mxu0 0.0
    %199 = vmatpush1.msra.mxu0 0.0
    %200 = vmatprep.subr.mxu0 0.0
    %201 = vmatpush1.msra.mxu0 0.0
    %202 = vmatprep.subr.mxu0 0.0
    %203 = vmatpush1.msra.mxu0 0.0
    %204 = vmatprep.subr.mxu0 0.0
    %205 = vmatpush1.msra.mxu0 0.0
    %206 = vmatprep.subr.mxu0 0.0
    %207 = vmatpush1.msra.mxu0 0.0
    %208 = vmatprep.mubr.f32.mxu0 0.0
    %209 = vmatmul.mubr.f32.gmra.mrb[0].mxu0 %v139
    %v210 = vpop.f32.mrb[0].mxu0
    %v211 = vadd.f32 0.0, %v210
    %v212 = vpop.f32.mrb[0].mxu0
    %213 = vdwg.mxu0
    %vm214 = vcmask 58368
    %v215 = vsel %vm214, %v211, -inf
    %216 = vmax.xlane.f32.xlu0 %v215
    %v217 = vpop.xlane.xlu0 %216
    %v218 = vsub.f32 %v211, %v217
    %v219 = vmul.f32 %v218, 1.442695
    %v220 = vpow.pop %v219
    %v221 = vsel %vm214, %v220, 0.0
    %222 = vadd.xlane.f32.xlu0 %v221
    %v223 = vpop.xlane.xlu0 %222
    %v224 = vrcp.pop %v223
    %v225 = vmul.f32 %v220, %v224
    %v226 = vlaneseq
    %v227 = vshrl.u32 %v226, 7
    %v228 = vlaneseq
    %v229 = vand.u32 %v228, 127
    %v230 = vadd.s32 %v229, 128
    %v231 = vmul.u32 %v227, 32
    %vm232 = vcmp.ge.s32.totalorder %v229, %v231
    %vm233 = vcmp.ge.s32.totalorder %v230, %v231
    %v234 = vadd.s32 %v231, 32
    %vm235 = vcmp.lt.s32.totalorder %v229, %v234
    %vm236 = vcmp.lt.s32.totalorder %v230, %v234
    %vm237 = vmand %vm232, %vm235
    %vm238 = vmand %vm233, %vm236
    %v239 = vsel %vm237, 1, 0
    %v240 = vsel %vm238, 1, 0
    %v241 = vcvt.s32.f32 %v239
    %v242 = vcvt.s32.f32 %v240
    %vm243 = vcmask 64512
    %v245 = vsel %vm243, %v225, 0
    %247 = vmatprep.subr.mxu0 %v242
    %248 = vmatpush1.msra.mxu0 %v241
    %249 = vmatprep.subr.mxu0 0.0
    %250 = vmatpush1.msra.mxu0 0.0
    %251 = vmatprep.subr.mxu0 0.0
    %252 = vmatpush1.msra.mxu0 0.0
    %253 = vmatprep.subr.mxu0 0.0
    %254 = vmatpush1.msra.mxu0 0.0
    %255 = vmatprep.subr.mxu0 0.0
    %256 = vmatpush1.msra.mxu0 0.0
    %257 = vmatprep.subr.mxu0 0.0
    %258 = vmatpush1.msra.mxu0 0.0
    %259 = vmatprep.subr.mxu0 0.0
    %260 = vmatpush1.msra.mxu0 0.0
    %261 = vmatprep.subr.mxu0 0.0
    %262 = vmatpush1.msra.mxu0 0.0
    %263 = vmatprep.subr.mxu0 0.0
    %264 = vmatpush1.msra.mxu0 0.0
    %265 = vmatprep.subr.mxu0 0.0
    %266 = vmatpush1.msra.mxu0 0.0
    %267 = vmatprep.subr.mxu0 0.0
    %268 = vmatpush1.msra.mxu0 0.0
    %269 = vmatprep.subr.mxu0 0.0
    %270 = vmatpush1.msra.mxu0 0.0
    %271 = vmatprep.subr.mxu0 0.0
    %272 = vmatpush1.msra.mxu0 0.0
    %273 = vmatprep.subr.mxu0 0.0
    %274 = vmatpush1.msra.mxu0 0.0
    %275 = vmatprep.subr.mxu0 0.0
    %276 = vmatpush1.msra.mxu0 0.0
    %277 = vmatprep.subr.mxu0 0.0
    %278 = vmatpush1.msra.mxu0 0.0
    %279 = vmatprep.subr.mxu0 0.0
    %280 = vmatpush1.msra.mxu0 0.0
    %281 = vmatprep.subr.mxu0 0.0
    %282 = vmatpush1.msra.mxu0 0.0
    %283 = vmatprep.subr.mxu0 0.0
    %284 = vmatpush1.msra.mxu0 0.0
    %285 = vmatprep.subr.mxu0 0.0
    %286 = vmatpush1.msra.mxu0 0.0
    %287 = vmatprep.subr.mxu0 0.0
    %288 = vmatpush1.msra.mxu0 0.0
    %289 = vmatprep.subr.mxu0 0.0
    %290 = vmatpush1.msra.mxu0 0.0
    %291 = vmatprep.subr.mxu0 0.0
    %292 = vmatpush1.msra.mxu0 0.0
    %293 = vmatprep.subr.mxu0 0.0
    %294 = vmatpush1.msra.mxu0 0.0
    %295 = vmatprep.subr.mxu0 0.0
    %296 = vmatpush1.msra.mxu0 0.0
    %297 = vmatprep.subr.mxu0 0.0
    %298 = vmatpush1.msra.mxu0 0.0
    %299 = vmatprep.subr.mxu0 0.0
    %300 = vmatpush1.msra.mxu0 0.0
    %301 = vmatprep.subr.mxu0 0.0
    %302 = vmatpush1.msra.mxu0 0.0
    %303 = vmatprep.subr.mxu0 0.0
    %304 = vmatpush1.msra.mxu0 0.0
    %305 = vmatprep.subr.mxu0 0.0
    %306 = vmatpush1.msra.mxu0 0.0
    %307 = vmatprep.subr.mxu0 0.0
    %308 = vmatpush1.msra.mxu0 0.0
    %309 = vmatprep.subr.mxu0 0.0
    %310 = vmatpush1.msra.mxu0 0.0
    %311 = vmatprep.mubr.f32.mxu0 0.0
    %312 = vmatmul.mubr.f32.gmra.mrb[0].mxu0 %v245
    %v313 = vpop.f32.mrb[0].mxu0
    %v314 = vadd.f32 0.0, %v313
    %v315 = vpop.f32.mrb[0].mxu0
    %v316 = vadd.f32 0.0, %v315
    %317 = vdwg.mxu0
    %v318 = vld [vmem:[%s0] sm:$0xf]
    %v321 = vcombine.low %v314, %v316
    %v323 = vunpack.c.l.s4 1983009808
    %v324 = vunpack.c.0.s8 %v323
    %v325 = vlaneseq
    %v326 = vshrl.u32 %v325, 7
    %v327 = vsub.s32 %v324, %v326
    %v328 = vrot.slane %v321, %v327
    %v330 = vmul.f32 %v318, %v328
    %v331 = vld [vmem:[%s2] sm:$0xff]
    %v332 = vld [vmem:[%s2 + $0x8] sm:$0xff]
    %v333 = vld [vmem:[%s2 + $0x10] sm:$0xff]
    %v334 = vld [vmem:[%s2 + $0x18] sm:$0xff]
    %v335 = vld [vmem:[%s2 + $0x20] sm:$0xff]
    %v336 = vld [vmem:[%s2 + $0x28] sm:$0xff]
    %v337 = vld [vmem:[%s2 + $0x30] sm:$0xff]
    %v338 = vld [vmem:[%s2 + $0x38] sm:$0xff]
    %s339 = smul.u32 4, 32
    %s340 = smul.u32 %s339, 8
    %s341 = sshll.u32 %s340, 4
    %342 = dma.done [#allocation3], %s341
    %v345 = vunpack.c.l.s4 1983009808
    %v346 = vunpack.c.0.s8 %v345
    %v347 = vlaneseq
    %v348 = vshrl.u32 %v347, 7
    %v349 = vsub.s32 %v346, %v348
    %v350 = vrot.slane %v330, %v349
    %v351 = vcombine.high %v350, %v350
    %v354 = vpack.c.bf16 %v350, %v350
    %v355 = vpack.c.bf16 %v351, %v351
    %v356 = vld [vmem:[#allocation2] sm:$0xff]
    %v357 = vld [vmem:[#allocation2 + $0x8] sm:$0xff]
    %v358 = vld [vmem:[#allocation2 + $0x10] sm:$0xff]
    %v359 = vld [vmem:[#allocation2 + $0x18] sm:$0xff]
    %v360 = vld [vmem:[#allocation2 + $0x20] sm:$0xff]
    %v361 = vld [vmem:[#allocation2 + $0x28] sm:$0xff]
    %v362 = vld [vmem:[#allocation2 + $0x30] sm:$0xff]
    %v363 = vld [vmem:[#allocation2 + $0x38] sm:$0xff]
    %v364 = vld [vmem:[#allocation2 + $0x40] sm:$0xff]
    %v365 = vld [vmem:[#allocation2 + $0x48] sm:$0xff]
    %v366 = vld [vmem:[#allocation2 + $0x50] sm:$0xff]
    %v367 = vld [vmem:[#allocation2 + $0x58] sm:$0xff]
    %v368 = vld [vmem:[#allocation2 + $0x60] sm:$0xff]
    %v369 = vld [vmem:[#allocation2 + $0x68] sm:$0xff]
    %v370 = vld [vmem:[#allocation2 + $0x70] sm:$0xff]
    %v371 = vld [vmem:[#allocation2 + $0x78] sm:$0xff]
    %v372 = vld [vmem:[#allocation2 + $0x80] sm:$0xff]
    %v373 = vld [vmem:[#allocation2 + $0x88] sm:$0xff]
    %v374 = vld [vmem:[#allocation2 + $0x90] sm:$0xff]
    %v375 = vld [vmem:[#allocation2 + $0x98] sm:$0xff]
    %v376 = vld [vmem:[#allocation2 + $0xa0] sm:$0xff]
    %v377 = vld [vmem:[#allocation2 + $0xa8] sm:$0xff]
    %v378 = vld [vmem:[#allocation2 + $0xb0] sm:$0xff]
    %v379 = vld [vmem:[#allocation2 + $0xb8] sm:$0xff]
    %v380 = vld [vmem:[#allocation2 + $0xc0] sm:$0xff]
    %v381 = vld [vmem:[#allocation2 + $0xc8] sm:$0xff]
    %v382 = vld [vmem:[#allocation2 + $0xd0] sm:$0xff]
    %v383 = vld [vmem:[#allocation2 + $0xd8] sm:$0xff]
    %v384 = vld [vmem:[#allocation2 + $0xe0] sm:$0xff]
    %v385 = vld [vmem:[#allocation2 + $0xe8] sm:$0xff]
    %v386 = vld [vmem:[#allocation2 + $0xf0] sm:$0xff]
    %v387 = vld [vmem:[#allocation2 + $0xf8] sm:$0xff]
    %v388 = vld [vmem:[#allocation2 + $0x100] sm:$0xff]
    %v389 = vld [vmem:[#allocation2 + $0x108] sm:$0xff]
    %v390 = vld [vmem:[#allocation2 + $0x110] sm:$0xff]
    %v391 = vld [vmem:[#allocation2 + $0x118] sm:$0xff]
    %v392 = vld [vmem:[#allocation2 + $0x120] sm:$0xff]
    %v393 = vld [vmem:[#allocation2 + $0x128] sm:$0xff]
    %v394 = vld [vmem:[#allocation2 + $0x130] sm:$0xff]
    %v395 = vld [vmem:[#allocation2 + $0x138] sm:$0xff]
    %v396 = vld [vmem:[#allocation2 + $0x140] sm:$0xff]
    %v397 = vld [vmem:[#allocation2 + $0x148] sm:$0xff]
    %v398 = vld [vmem:[#allocation2 + $0x150] sm:$0xff]
    %v399 = vld [vmem:[#allocation2 + $0x158] sm:$0xff]
    %v400 = vld [vmem:[#allocation2 + $0x160] sm:$0xff]
    %v401 = vld [vmem:[#allocation2 + $0x168] sm:$0xff]
    %v402 = vld [vmem:[#allocation2 + $0x170] sm:$0xff]
    %v403 = vld [vmem:[#allocation2 + $0x178] sm:$0xff]
    %v404 = vld [vmem:[#allocation2 + $0x180] sm:$0xff]
    %v405 = vld [vmem:[#allocation2 + $0x188] sm:$0xff]
    %v406 = vld [vmem:[#allocation2 + $0x190] sm:$0xff]
    %v407 = vld [vmem:[#allocation2 + $0x198] sm:$0xff]
    %v408 = vld [vmem:[#allocation2 + $0x1a0] sm:$0xff]
    %v409 = vld [vmem:[#allocation2 + $0x1a8] sm:$0xff]
    %v410 = vld [vmem:[#allocation2 + $0x1b0] sm:$0xff]
    %v411 = vld [vmem:[#allocation2 + $0x1b8] sm:$0xff]
    %v412 = vld [vmem:[#allocation2 + $0x1c0] sm:$0xff]
    %v413 = vld [vmem:[#allocation2 + $0x1c8] sm:$0xff]
    %v414 = vld [vmem:[#allocation2 + $0x1d0] sm:$0xff]
    %v415 = vld [vmem:[#allocation2 + $0x1d8] sm:$0xff]
    %v416 = vld [vmem:[#allocation2 + $0x1e0] sm:$0xff]
    %v417 = vld [vmem:[#allocation2 + $0x1e8] sm:$0xff]
    %v418 = vld [vmem:[#allocation2 + $0x1f0] sm:$0xff]
    %v419 = vld [vmem:[#allocation2 + $0x1f8] sm:$0xff]
    %v420 = vld [vmem:[#allocation2 + $0x200] sm:$0xff]
    %v421 = vld [vmem:[#allocation2 + $0x208] sm:$0xff]
    %v422 = vld [vmem:[#allocation2 + $0x210] sm:$0xff]
    %v423 = vld [vmem:[#allocation2 + $0x218] sm:$0xff]
    %v424 = vld [vmem:[#allocation2 + $0x220] sm:$0xff]
    %v425 = vld [vmem:[#allocation2 + $0x228] sm:$0xff]
    %v426 = vld [vmem:[#allocation2 + $0x230] sm:$0xff]
    %v427 = vld [vmem:[#allocation2 + $0x238] sm:$0xff]
    %v428 = vld [vmem:[#allocation2 + $0x240] sm:$0xff]
    %v429 = vld [vmem:[#allocation2 + $0x248] sm:$0xff]
    %v430 = vld [vmem:[#allocation2 + $0x250] sm:$0xff]
    %v431 = vld [vmem:[#allocation2 + $0x258] sm:$0xff]
    %v432 = vld [vmem:[#allocation2 + $0x260] sm:$0xff]
    %v433 = vld [vmem:[#allocation2 + $0x268] sm:$0xff]
    %v434 = vld [vmem:[#allocation2 + $0x270] sm:$0xff]
    %v435 = vld [vmem:[#allocation2 + $0x278] sm:$0xff]
    %v436 = vld [vmem:[#allocation2 + $0x280] sm:$0xff]
    %v437 = vld [vmem:[#allocation2 + $0x288] sm:$0xff]
    %v438 = vld [vmem:[#allocation2 + $0x290] sm:$0xff]
    %v439 = vld [vmem:[#allocation2 + $0x298] sm:$0xff]
    %v440 = vld [vmem:[#allocation2 + $0x2a0] sm:$0xff]
    %v441 = vld [vmem:[#allocation2 + $0x2a8] sm:$0xff]
    %v442 = vld [vmem:[#allocation2 + $0x2b0] sm:$0xff]
    %v443 = vld [vmem:[#allocation2 + $0x2b8] sm:$0xff]
    %v444 = vld [vmem:[#allocation2 + $0x2c0] sm:$0xff]
    %v445 = vld [vmem:[#allocation2 + $0x2c8] sm:$0xff]
    %v446 = vld [vmem:[#allocation2 + $0x2d0] sm:$0xff]
    %v447 = vld [vmem:[#allocation2 + $0x2d8] sm:$0xff]
    %v448 = vld [vmem:[#allocation2 + $0x2e0] sm:$0xff]
    %v449 = vld [vmem:[#allocation2 + $0x2e8] sm:$0xff]
    %v450 = vld [vmem:[#allocation2 + $0x2f0] sm:$0xff]
    %v451 = vld [vmem:[#allocation2 + $0x2f8] sm:$0xff]
    %v452 = vld [vmem:[#allocation2 + $0x300] sm:$0xff]
    %v453 = vld [vmem:[#allocation2 + $0x308] sm:$0xff]
    %v454 = vld [vmem:[#allocation2 + $0x310] sm:$0xff]
    %v455 = vld [vmem:[#allocation2 + $0x318] sm:$0xff]
    %v456 = vld [vmem:[#allocation2 + $0x320] sm:$0xff]
    %v457 = vld [vmem:[#allocation2 + $0x328] sm:$0xff]
    %v458 = vld [vmem:[#allocation2 + $0x330] sm:$0xff]
    %v459 = vld [vmem:[#allocation2 + $0x338] sm:$0xff]
    %v460 = vld [vmem:[#allocation2 + $0x340] sm:$0xff]
    %v461 = vld [vmem:[#allocation2 + $0x348] sm:$0xff]
    %v462 = vld [vmem:[#allocation2 + $0x350] sm:$0xff]
    %v463 = vld [vmem:[#allocation2 + $0x358] sm:$0xff]
    %v464 = vld [vmem:[#allocation2 + $0x360] sm:$0xff]
    %v465 = vld [vmem:[#allocation2 + $0x368] sm:$0xff]
    %v466 = vld [vmem:[#allocation2 + $0x370] sm:$0xff]
    %v467 = vld [vmem:[#allocation2 + $0x378] sm:$0xff]
    %v468 = vld [vmem:[#allocation2 + $0x380] sm:$0xff]
    %v469 = vld [vmem:[#allocation2 + $0x388] sm:$0xff]
    %v470 = vld [vmem:[#allocation2 + $0x390] sm:$0xff]
    %v471 = vld [vmem:[#allocation2 + $0x398] sm:$0xff]
    %v472 = vld [vmem:[#allocation2 + $0x3a0] sm:$0xff]
    %v473 = vld [vmem:[#allocation2 + $0x3a8] sm:$0xff]
    %v474 = vld [vmem:[#allocation2 + $0x3b0] sm:$0xff]
    %v475 = vld [vmem:[#allocation2 + $0x3b8] sm:$0xff]
    %v476 = vld [vmem:[#allocation2 + $0x3c0] sm:$0xff]
    %v477 = vld [vmem:[#allocation2 + $0x3c8] sm:$0xff]
    %v478 = vld [vmem:[#allocation2 + $0x3d0] sm:$0xff]
    %v479 = vld [vmem:[#allocation2 + $0x3d8] sm:$0xff]
    %v480 = vld [vmem:[#allocation2 + $0x3e0] sm:$0xff]
    %v481 = vld [vmem:[#allocation2 + $0x3e8] sm:$0xff]
    %v482 = vld [vmem:[#allocation2 + $0x3f0] sm:$0xff]
    %v483 = vld [vmem:[#allocation2 + $0x3f8] sm:$0xff]
    %484 = vmatprep.subr.bf16.mxu0 %v357
    %485 = vmatpush1.bf16.msra.mxu0 %v356
    %486 = vmatprep.subr.bf16.mxu0 %v365
    %487 = vmatpush1.bf16.msra.mxu0 %v364
    %488 = vmatprep.subr.bf16.mxu0 %v373
    %489 = vmatpush1.bf16.msra.mxu0 %v372
    %490 = vmatprep.subr.bf16.mxu0 %v381
    %491 = vmatpush1.bf16.msra.mxu0 %v380
    %492 = vmatprep.subr.bf16.mxu0 %v389
    %493 = vmatpush1.bf16.msra.mxu0 %v388
    %494 = vmatprep.subr.bf16.mxu0 %v397
    %495 = vmatpush1.bf16.msra.mxu0 %v396
    %496 = vmatprep.subr.bf16.mxu0 %v405
    %497 = vmatpush1.bf16.msra.mxu0 %v404
    %498 = vmatprep.subr.bf16.mxu0 %v413
    %499 = vmatpush1.bf16.msra.mxu0 %v412
    %500 = vmatprep.subr.bf16.mxu0 %v421
    %501 = vmatpush1.bf16.msra.mxu0 %v420
    %502 = vmatprep.subr.bf16.mxu0 %v429
    %503 = vmatpush1.bf16.msra.mxu0 %v428
    %504 = vmatprep.subr.bf16.mxu0 %v437
    %505 = vmatpush1.bf16.msra.mxu0 %v436
    %506 = vmatprep.subr.bf16.mxu0 %v445
    %507 = vmatpush1.bf16.msra.mxu0 %v444
    %508 = vmatprep.subr.bf16.mxu0 %v453
    %509 = vmatpush1.bf16.msra.mxu0 %v452
    %510 = vmatprep.subr.bf16.mxu0 %v461
    %511 = vmatpush1.bf16.msra.mxu0 %v460
    %512 = vmatprep.subr.bf16.mxu0 %v469
    %513 = vmatpush1.bf16.msra.mxu0 %v468
    %514 = vmatprep.subr.bf16.mxu0 %v477
    %515 = vmatpush1.bf16.msra.mxu0 %v476
    %516 = vmatprep.mubr.bf16.mxu0 %v355
    %517 = vmatmul.mubr.bf16.gmra.mrb[0].mxu0 %v354
    %v518 = vpop.f32.mrb[0].mxu0
    %v519 = vadd.f32 0.0, %v518
    %v520 = vpop.f32.mrb[0].mxu0
    %v521 = vadd.f32 0.0, %v520
    %v522 = vpop.f32.mrb[0].mxu0
    %v523 = vpop.f32.mrb[0].mxu0
    %524 = vdwg.mxu0
    %525 = vmatprep.subr.bf16.mxu0 %v359
    %526 = vmatpush1.bf16.msra.mxu0 %v358
    %527 = vmatprep.subr.bf16.mxu0 %v367
    %528 = vmatpush1.bf16.msra.mxu0 %v366
    %529 = vmatprep.subr.bf16.mxu0 %v375
    %530 = vmatpush1.bf16.msra.mxu0 %v374
    %531 = vmatprep.subr.bf16.mxu0 %v383
    %532 = vmatpush1.bf16.msra.mxu0 %v382
    %533 = vmatprep.subr.bf16.mxu0 %v391
    %534 = vmatpush1.bf16.msra.mxu0 %v390
    %535 = vmatprep.subr.bf16.mxu0 %v399
    %536 = vmatpush1.bf16.msra.mxu0 %v398
    %537 = vmatprep.subr.bf16.mxu0 %v407
    %538 = vmatpush1.bf16.msra.mxu0 %v406
    %539 = vmatprep.subr.bf16.mxu0 %v415
    %540 = vmatpush1.bf16.msra.mxu0 %v414
    %541 = vmatprep.subr.bf16.mxu0 %v423
    %542 = vmatpush1.bf16.msra.mxu0 %v422
    %543 = vmatprep.subr.bf16.mxu0 %v431
    %544 = vmatpush1.bf16.msra.mxu0 %v430
    %545 = vmatprep.subr.bf16.mxu0 %v439
    %546 = vmatpush1.bf16.msra.mxu0 %v438
    %547 = vmatprep.subr.bf16.mxu0 %v447
    %548 = vmatpush1.bf16.msra.mxu0 %v446
    %549 = vmatprep.subr.bf16.mxu0 %v455
    %550 = vmatpush1.bf16.msra.mxu0 %v454
    %551 = vmatprep.subr.bf16.mxu0 %v463
    %552 = vmatpush1.bf16.msra.mxu0 %v462
    %553 = vmatprep.subr.bf16.mxu0 %v471
    %554 = vmatpush1.bf16.msra.mxu0 %v470
    %555 = vmatprep.subr.bf16.mxu0 %v479
    %556 = vmatpush1.bf16.msra.mxu0 %v478
    %557 = vmatprep.mubr.bf16.mxu0 %v355
    %558 = vmatmul.mubr.bf16.gmra.mrb[0].mxu0 %v354
    %v559 = vpop.f32.mrb[0].mxu0
    %v560 = vadd.f32 0.0, %v559
    %v561 = vpop.f32.mrb[0].mxu0
    %v562 = vadd.f32 0.0, %v561
    %v563 = vpop.f32.mrb[0].mxu0
    %v564 = vpop.f32.mrb[0].mxu0
    %565 = vdwg.mxu0
    %566 = vmatprep.subr.bf16.mxu0 %v361
    %567 = vmatpush1.bf16.msra.mxu0 %v360
    %568 = vmatprep.subr.bf16.mxu0 %v369
    %569 = vmatpush1.bf16.msra.mxu0 %v368
    %570 = vmatprep.subr.bf16.mxu0 %v377
    %571 = vmatpush1.bf16.msra.mxu0 %v376
    %572 = vmatprep.subr.bf16.mxu0 %v385
    %573 = vmatpush1.bf16.msra.mxu0 %v384
    %574 = vmatprep.subr.bf16.mxu0 %v393
    %575 = vmatpush1.bf16.msra.mxu0 %v392
    %576 = vmatprep.subr.bf16.mxu0 %v401
    %577 = vmatpush1.bf16.msra.mxu0 %v400
    %578 = vmatprep.subr.bf16.mxu0 %v409
    %579 = vmatpush1.bf16.msra.mxu0 %v408
    %580 = vmatprep.subr.bf16.mxu0 %v417
    %581 = vmatpush1.bf16.msra.mxu0 %v416
    %582 = vmatprep.subr.bf16.mxu0 %v425
    %583 = vmatpush1.bf16.msra.mxu0 %v424
    %584 = vmatprep.subr.bf16.mxu0 %v433
    %585 = vmatpush1.bf16.msra.mxu0 %v432
    %586 = vmatprep.subr.bf16.mxu0 %v441
    %587 = vmatpush1.bf16.msra.mxu0 %v440
    %588 = vmatprep.subr.bf16.mxu0 %v449
    %589 = vmatpush1.bf16.msra.mxu0 %v448
    %590 = vmatprep.subr.bf16.mxu0 %v457
    %591 = vmatpush1.bf16.msra.mxu0 %v456
    %592 = vmatprep.subr.bf16.mxu0 %v465
    %593 = vmatpush1.bf16.msra.mxu0 %v464
    %594 = vmatprep.subr.bf16.mxu0 %v473
    %595 = vmatpush1.bf16.msra.mxu0 %v472
    %596 = vmatprep.subr.bf16.mxu0 %v481
    %597 = vmatpush1.bf16.msra.mxu0 %v480
    %598 = vmatprep.mubr.bf16.mxu0 %v355
    %599 = vmatmul.mubr.bf16.gmra.mrb[0].mxu0 %v354
    %v600 = vpop.f32.mrb[0].mxu0
    %v601 = vadd.f32 0.0, %v600
    %v602 = vpop.f32.mrb[0].mxu0
    %v603 = vadd.f32 0.0, %v602
    %v604 = vpop.f32.mrb[0].mxu0
    %v605 = vpop.f32.mrb[0].mxu0
    %606 = vdwg.mxu0
    %607 = vmatprep.subr.bf16.mxu0 %v363
    %608 = vmatpush1.bf16.msra.mxu0 %v362
    %609 = vmatprep.subr.bf16.mxu0 %v371
    %610 = vmatpush1.bf16.msra.mxu0 %v370
    %611 = vmatprep.subr.bf16.mxu0 %v379
    %612 = vmatpush1.bf16.msra.mxu0 %v378
    %613 = vmatprep.subr.bf16.mxu0 %v387
    %614 = vmatpush1.bf16.msra.mxu0 %v386
    %615 = vmatprep.subr.bf16.mxu0 %v395
    %616 = vmatpush1.bf16.msra.mxu0 %v394
    %617 = vmatprep.subr.bf16.mxu0 %v403
    %618 = vmatpush1.bf16.msra.mxu0 %v402
    %619 = vmatprep.subr.bf16.mxu0 %v411
    %620 = vmatpush1.bf16.msra.mxu0 %v410
    %621 = vmatprep.subr.bf16.mxu0 %v419
    %622 = vmatpush1.bf16.msra.mxu0 %v418
    %623 = vmatprep.subr.bf16.mxu0 %v427
    %624 = vmatpush1.bf16.msra.mxu0 %v426
    %625 = vmatprep.subr.bf16.mxu0 %v435
    %626 = vmatpush1.bf16.msra.mxu0 %v434
    %627 = vmatprep.subr.bf16.mxu0 %v443
    %628 = vmatpush1.bf16.msra.mxu0 %v442
    %629 = vmatprep.subr.bf16.mxu0 %v451
    %630 = vmatpush1.bf16.msra.mxu0 %v450
    %631 = vmatprep.subr.bf16.mxu0 %v459
    %632 = vmatpush1.bf16.msra.mxu0 %v458
    %633 = vmatprep.subr.bf16.mxu0 %v467
    %634 = vmatpush1.bf16.msra.mxu0 %v466
    %635 = vmatprep.subr.bf16.mxu0 %v475
    %636 = vmatpush1.bf16.msra.mxu0 %v474
    %637 = vmatprep.subr.bf16.mxu0 %v483
    %638 = vmatpush1.bf16.msra.mxu0 %v482
    %639 = vmatprep.mubr.bf16.mxu0 %v355
    %640 = vmatmul.mubr.bf16.gmra.mrb[0].mxu0 %v354
    %v641 = vpop.f32.mrb[0].mxu0
    %v642 = vadd.f32 0.0, %v641
    %v643 = vpop.f32.mrb[0].mxu0
    %v644 = vadd.f32 0.0, %v643
    %v645 = vpop.f32.mrb[0].mxu0
    %v646 = vpop.f32.mrb[0].mxu0
    %647 = vdwg.mxu0
    %648 = vmatprep.subr.mxu0 %v332
    %649 = vmatpush1.msra.mxu0 %v331
    %650 = vmatprep.subr.mxu0 0.0
    %651 = vmatpush1.msra.mxu0 0.0
    %652 = vmatprep.subr.mxu0 0.0
    %653 = vmatpush1.msra.mxu0 0.0
    %654 = vmatprep.subr.mxu0 0.0
    %655 = vmatpush1.msra.mxu0 0.0
    %656 = vmatprep.subr.mxu0 0.0
    %657 = vmatpush1.msra.mxu0 0.0
    %658 = vmatprep.subr.mxu0 0.0
    %659 = vmatpush1.msra.mxu0 0.0
    %660 = vmatprep.subr.mxu0 0.0
    %661 = vmatpush1.msra.mxu0 0.0
    %662 = vmatprep.subr.mxu0 0.0
    %663 = vmatpush1.msra.mxu0 0.0
    %664 = vmatprep.subr.mxu0 0.0
    %665 = vmatpush1.msra.mxu0 0.0
    %666 = vmatprep.subr.mxu0 0.0
    %667 = vmatpush1.msra.mxu0 0.0
    %668 = vmatprep.subr.mxu0 0.0
    %669 = vmatpush1.msra.mxu0 0.0
    %670 = vmatprep.subr.mxu0 0.0
    %671 = vmatpush1.msra.mxu0 0.0
    %672 = vmatprep.subr.mxu0 0.0
    %673 = vmatpush1.msra.mxu0 0.0
    %674 = vmatprep.subr.mxu0 0.0
    %675 = vmatpush1.msra.mxu0 0.0
    %676 = vmatprep.subr.mxu0 0.0
    %677 = vmatpush1.msra.mxu0 0.0
    %678 = vmatprep.subr.mxu0 0.0
    %679 = vmatpush1.msra.mxu0 0.0
    %680 = vmatprep.subr.mxu0 0.0
    %681 = vmatpush1.msra.mxu0 0.0
    %682 = vmatprep.subr.mxu0 0.0
    %683 = vmatpush1.msra.mxu0 0.0
    %684 = vmatprep.subr.mxu0 0.0
    %685 = vmatpush1.msra.mxu0 0.0
    %686 = vmatprep.subr.mxu0 0.0
    %687 = vmatpush1.msra.mxu0 0.0
    %688 = vmatprep.subr.mxu0 0.0
    %689 = vmatpush1.msra.mxu0 0.0
    %690 = vmatprep.subr.mxu0 0.0
    %691 = vmatpush1.msra.mxu0 0.0
    %692 = vmatprep.subr.mxu0 0.0
    %693 = vmatpush1.msra.mxu0 0.0
    %694 = vmatprep.subr.mxu0 0.0
    %695 = vmatpush1.msra.mxu0 0.0
    %696 = vmatprep.subr.mxu0 0.0
    %697 = vmatpush1.msra.mxu0 0.0
    %698 = vmatprep.subr.mxu0 0.0
    %699 = vmatpush1.msra.mxu0 0.0
    %700 = vmatprep.subr.mxu0 0.0
    %701 = vmatpush1.msra.mxu0 0.0
    %702 = vmatprep.subr.mxu0 0.0
    %703 = vmatpush1.msra.mxu0 0.0
    %704 = vmatprep.subr.mxu0 0.0
    %705 = vmatpush1.msra.mxu0 0.0
    %706 = vmatprep.subr.mxu0 0.0
    %707 = vmatpush1.msra.mxu0 0.0
    %708 = vmatprep.subr.mxu0 0.0
    %709 = vmatpush1.msra.mxu0 0.0
    %710 = vmatprep.subr.mxu0 0.0
    %711 = vmatpush1.msra.mxu0 0.0
    %712 = vmatprep.mubr.f32.mxu0 0.0
    %713 = vmatmul.mubr.f32.gmra.mrb[0].mxu0 %v245
    %v714 = vpop.f32.mrb[0].mxu0
    %v715 = vadd.f32 %v519, %v714
    %v716 = vpop.f32.mrb[0].mxu0
    %v717 = vadd.f32 %v521, %v716
    %718 = vdwg.mxu0
    %719 = vmatprep.subr.mxu0 %v334
    %720 = vmatpush1.msra.mxu0 %v333
    %721 = vmatprep.subr.mxu0 0.0
    %722 = vmatpush1.msra.mxu0 0.0
    %723 = vmatprep.subr.mxu0 0.0
    %724 = vmatpush1.msra.mxu0 0.0
    %725 = vmatprep.subr.mxu0 0.0
    %726 = vmatpush1.msra.mxu0 0.0
    %727 = vmatprep.subr.mxu0 0.0
    %728 = vmatpush1.msra.mxu0 0.0
    %729 = vmatprep.subr.mxu0 0.0
    %730 = vmatpush1.msra.mxu0 0.0
    %731 = vmatprep.subr.mxu0 0.0
    %732 = vmatpush1.msra.mxu0 0.0
    %733 = vmatprep.subr.mxu0 0.0
    %734 = vmatpush1.msra.mxu0 0.0
    %735 = vmatprep.subr.mxu0 0.0
    %736 = vmatpush1.msra.mxu0 0.0
    %737 = vmatprep.subr.mxu0 0.0
    %738 = vmatpush1.msra.mxu0 0.0
    %739 = vmatprep.subr.mxu0 0.0
    %740 = vmatpush1.msra.mxu0 0.0
    %741 = vmatprep.subr.mxu0 0.0
    %742 = vmatpush1.msra.mxu0 0.0
    %743 = vmatprep.subr.mxu0 0.0
    %744 = vmatpush1.msra.mxu0 0.0
    %745 = vmatprep.subr.mxu0 0.0
    %746 = vmatpush1.msra.mxu0 0.0
    %747 = vmatprep.subr.mxu0 0.0
    %748 = vmatpush1.msra.mxu0 0.0
    %749 = vmatprep.subr.mxu0 0.0
    %750 = vmatpush1.msra.mxu0 0.0
    %751 = vmatprep.subr.mxu0 0.0
    %752 = vmatpush1.msra.mxu0 0.0
    %753 = vmatprep.subr.mxu0 0.0
    %754 = vmatpush1.msra.mxu0 0.0
    %755 = vmatprep.subr.mxu0 0.0
    %756 = vmatpush1.msra.mxu0 0.0
    %757 = vmatprep.subr.mxu0 0.0
    %758 = vmatpush1.msra.mxu0 0.0
    %759 = vmatprep.subr.mxu0 0.0
    %760 = vmatpush1.msra.mxu0 0.0
    %761 = vmatprep.subr.mxu0 0.0
    %762 = vmatpush1.msra.mxu0 0.0
    %763 = vmatprep.subr.mxu0 0.0
    %764 = vmatpush1.msra.mxu0 0.0
    %765 = vmatprep.subr.mxu0 0.0
    %766 = vmatpush1.msra.mxu0 0.0
    %767 = vmatprep.subr.mxu0 0.0
    %768 = vmatpush1.msra.mxu0 0.0
    %769 = vmatprep.subr.mxu0 0.0
    %770 = vmatpush1.msra.mxu0 0.0
    %771 = vmatprep.subr.mxu0 0.0
    %772 = vmatpush1.msra.mxu0 0.0
    %773 = vmatprep.subr.mxu0 0.0
    %774 = vmatpush1.msra.mxu0 0.0
    %775 = vmatprep.subr.mxu0 0.0
    %776 = vmatpush1.msra.mxu0 0.0
    %777 = vmatprep.subr.mxu0 0.0
    %778 = vmatpush1.msra.mxu0 0.0
    %779 = vmatprep.subr.mxu0 0.0
    %780 = vmatpush1.msra.mxu0 0.0
    %781 = vmatprep.subr.mxu0 0.0
    %782 = vmatpush1.msra.mxu0 0.0
    %783 = vmatprep.mubr.f32.mxu0 0.0
    %784 = vmatmul.mubr.f32.gmra.mrb[0].mxu0 %v245
    %v785 = vpop.f32.mrb[0].mxu0
    %v786 = vadd.f32 %v560, %v785
    %v787 = vpop.f32.mrb[0].mxu0
    %v788 = vadd.f32 %v562, %v787
    %789 = vdwg.mxu0
    %790 = vmatprep.subr.mxu0 %v336
    %791 = vmatpush1.msra.mxu0 %v335
    %792 = vmatprep.subr.mxu0 0.0
    %793 = vmatpush1.msra.mxu0 0.0
    %794 = vmatprep.subr.mxu0 0.0
    %795 = vmatpush1.msra.mxu0 0.0
    %796 = vmatprep.subr.mxu0 0.0
    %797 = vmatpush1.msra.mxu0 0.0
    %798 = vmatprep.subr.mxu0 0.0
    %799 = vmatpush1.msra.mxu0 0.0
    %800 = vmatprep.subr.mxu0 0.0
    %801 = vmatpush1.msra.mxu0 0.0
    %802 = vmatprep.subr.mxu0 0.0
    %803 = vmatpush1.msra.mxu0 0.0
    %804 = vmatprep.subr.mxu0 0.0
    %805 = vmatpush1.msra.mxu0 0.0
    %806 = vmatprep.subr.mxu0 0.0
    %807 = vmatpush1.msra.mxu0 0.0
    %808 = vmatprep.subr.mxu0 0.0
    %809 = vmatpush1.msra.mxu0 0.0
    %810 = vmatprep.subr.mxu0 0.0
    %811 = vmatpush1.msra.mxu0 0.0
    %812 = vmatprep.subr.mxu0 0.0
    %813 = vmatpush1.msra.mxu0 0.0
    %814 = vmatprep.subr.mxu0 0.0
    %815 = vmatpush1.msra.mxu0 0.0
    %816 = vmatprep.subr.mxu0 0.0
    %817 = vmatpush1.msra.mxu0 0.0
    %818 = vmatprep.subr.mxu0 0.0
    %819 = vmatpush1.msra.mxu0 0.0
    %820 = vmatprep.subr.mxu0 0.0
    %821 = vmatpush1.msra.mxu0 0.0
    %822 = vmatprep.subr.mxu0 0.0
    %823 = vmatpush1.msra.mxu0 0.0
    %824 = vmatprep.subr.mxu0 0.0
    %825 = vmatpush1.msra.mxu0 0.0
    %826 = vmatprep.subr.mxu0 0.0
    %827 = vmatpush1.msra.mxu0 0.0
    %828 = vmatprep.subr.mxu0 0.0
    %829 = vmatpush1.msra.mxu0 0.0
    %830 = vmatprep.subr.mxu0 0.0
    %831 = vmatpush1.msra.mxu0 0.0
    %832 = vmatprep.subr.mxu0 0.0
    %833 = vmatpush1.msra.mxu0 0.0
    %834 = vmatprep.subr.mxu0 0.0
    %835 = vmatpush1.msra.mxu0 0.0
    %836 = vmatprep.subr.mxu0 0.0
    %837 = vmatpush1.msra.mxu0 0.0
    %838 = vmatprep.subr.mxu0 0.0
    %839 = vmatpush1.msra.mxu0 0.0
    %840 = vmatprep.subr.mxu0 0.0
    %841 = vmatpush1.msra.mxu0 0.0
    %842 = vmatprep.subr.mxu0 0.0
    %843 = vmatpush1.msra.mxu0 0.0
    %844 = vmatprep.subr.mxu0 0.0
    %845 = vmatpush1.msra.mxu0 0.0
    %846 = vmatprep.subr.mxu0 0.0
    %847 = vmatpush1.msra.mxu0 0.0
    %848 = vmatprep.subr.mxu0 0.0
    %849 = vmatpush1.msra.mxu0 0.0
    %850 = vmatprep.subr.mxu0 0.0
    %851 = vmatpush1.msra.mxu0 0.0
    %852 = vmatprep.subr.mxu0 0.0
    %853 = vmatpush1.msra.mxu0 0.0
    %854 = vmatprep.mubr.f32.mxu0 0.0
    %855 = vmatmul.mubr.f32.gmra.mrb[0].mxu0 %v245
    %v856 = vpop.f32.mrb[0].mxu0
    %v857 = vadd.f32 %v601, %v856
    %v858 = vpop.f32.mrb[0].mxu0
    %v859 = vadd.f32 %v603, %v858
    %860 = vdwg.mxu0
    %861 = vmatprep.subr.mxu0 %v338
    %862 = vmatpush1.msra.mxu0 %v337
    %863 = vmatprep.subr.mxu0 0.0
    %864 = vmatpush1.msra.mxu0 0.0
    %865 = vmatprep.subr.mxu0 0.0
    %866 = vmatpush1.msra.mxu0 0.0
    %867 = vmatprep.subr.mxu0 0.0
    %868 = vmatpush1.msra.mxu0 0.0
    %869 = vmatprep.subr.mxu0 0.0
    %870 = vmatpush1.msra.mxu0 0.0
    %871 = vmatprep.subr.mxu0 0.0
    %872 = vmatpush1.msra.mxu0 0.0
    %873 = vmatprep.subr.mxu0 0.0
    %874 = vmatpush1.msra.mxu0 0.0
    %875 = vmatprep.subr.mxu0 0.0
    %876 = vmatpush1.msra.mxu0 0.0
    %877 = vmatprep.subr.mxu0 0.0
    %878 = vmatpush1.msra.mxu0 0.0
    %879 = vmatprep.subr.mxu0 0.0
    %880 = vmatpush1.msra.mxu0 0.0
    %881 = vmatprep.subr.mxu0 0.0
    %882 = vmatpush1.msra.mxu0 0.0
    %883 = vmatprep.subr.mxu0 0.0
    %884 = vmatpush1.msra.mxu0 0.0
    %885 = vmatprep.subr.mxu0 0.0
    %886 = vmatpush1.msra.mxu0 0.0
    %887 = vmatprep.subr.mxu0 0.0
    %888 = vmatpush1.msra.mxu0 0.0
    %889 = vmatprep.subr.mxu0 0.0
    %890 = vmatpush1.msra.mxu0 0.0
    %891 = vmatprep.subr.mxu0 0.0
    %892 = vmatpush1.msra.mxu0 0.0
    %893 = vmatprep.subr.mxu0 0.0
    %894 = vmatpush1.msra.mxu0 0.0
    %895 = vmatprep.subr.mxu0 0.0
    %896 = vmatpush1.msra.mxu0 0.0
    %897 = vmatprep.subr.mxu0 0.0
    %898 = vmatpush1.msra.mxu0 0.0
    %899 = vmatprep.subr.mxu0 0.0
    %900 = vmatpush1.msra.mxu0 0.0
    %901 = vmatprep.subr.mxu0 0.0
    %902 = vmatpush1.msra.mxu0 0.0
    %903 = vmatprep.subr.mxu0 0.0
    %904 = vmatpush1.msra.mxu0 0.0
    %905 = vmatprep.subr.mxu0 0.0
    %906 = vmatpush1.msra.mxu0 0.0
    %907 = vmatprep.subr.mxu0 0.0
    %908 = vmatpush1.msra.mxu0 0.0
    %909 = vmatprep.subr.mxu0 0.0
    %910 = vmatpush1.msra.mxu0 0.0
    %911 = vmatprep.subr.mxu0 0.0
    %912 = vmatpush1.msra.mxu0 0.0
    %913 = vmatprep.subr.mxu0 0.0
    %914 = vmatpush1.msra.mxu0 0.0
    %915 = vmatprep.subr.mxu0 0.0
    %916 = vmatpush1.msra.mxu0 0.0
    %917 = vmatprep.subr.mxu0 0.0
    %918 = vmatpush1.msra.mxu0 0.0
    %919 = vmatprep.subr.mxu0 0.0
    %920 = vmatpush1.msra.mxu0 0.0
    %921 = vmatprep.subr.mxu0 0.0
    %922 = vmatpush1.msra.mxu0 0.0
    %923 = vmatprep.subr.mxu0 0.0
    %924 = vmatpush1.msra.mxu0 0.0
    %925 = vmatprep.mubr.f32.mxu0 0.0
    %926 = vmatmul.mubr.f32.gmra.mrb[0].mxu0 %v245
    %v927 = vpop.f32.mrb[0].mxu0
    %v928 = vadd.f32 %v642, %v927
    %v929 = vpop.f32.mrb[0].mxu0
    %v930 = vadd.f32 %v644, %v929
    %931 = vdwg.mxu0
    %v940 = vcombine.low %v715, %v717
    %v941 = vcombine.low %v786, %v788
    %v943 = vunpack.c.l.s4 1983009808
    %v944 = vunpack.c.0.s8 %v943
    %v945 = vlaneseq
    %v946 = vshrl.u32 %v945, 7
    %v947 = vsub.s32 %v944, %v946
    %v948 = vrot.slane %v940, %v947
    %v950 = vunpack.c.l.s4 1983009808
    %v951 = vunpack.c.0.s8 %v950
    %v952 = vlaneseq
    %v953 = vshrl.u32 %v952, 7
    %v954 = vsub.s32 %v951, %v953
    %v955 = vrot.slane %v941, %v954
    %v956 = vcombine.low %v948, %v955
    %v957 = vcombine.low %v857, %v859
    %v958 = vcombine.low %v928, %v930
    %v960 = vunpack.c.l.s4 1983009808
    %v961 = vunpack.c.0.s8 %v960
    %v962 = vlaneseq
    %v963 = vshrl.u32 %v962, 7
    %v964 = vsub.s32 %v961, %v963
    %v965 = vrot.slane %v957, %v964
    %v967 = vunpack.c.l.s4 1983009808
    %v968 = vunpack.c.0.s8 %v967
    %v969 = vlaneseq
    %v970 = vshrl.u32 %v969, 7
    %v971 = vsub.s32 %v968, %v970
    %v972 = vrot.slane %v958, %v971
    %v973 = vcombine.low %v965, %v972
    %976 = vst [vmem:[%s4] sm:$0xff] %v956
    %977 = vst [vmem:[%s4 + $0x8] sm:$0xff] %v973
    %v980 = vunpack.c.l.s4 1983009808
    %v981 = vunpack.c.0.s8 %v980
    %v982 = vlaneseq
    %v983 = vshrl.u32 %v982, 7
    %v984 = vsub.s32 %v981, %v983
    %v985 = vrot.slane %v211, %v984
    %986 = vrot.lane.b32.xlu0 %v985, 64
    %v987 = vpop.permute.xlu0 %986
    %vm989 = vcmask 583168
    %990 = vst.msk [vmem:[%s4 + $0xe] sm:$0x3] %vm989, %v987
    // Predicated region
    $region14: #{_fused_forward.1} parent=1 // pred_check
      _
    $region15: #{_fused_forward.1} parent=1 // pred_check_branch
      %992 = sbr.rel (0) target = $region17
    $region16: #{_fused_forward.1} parent=1 // pred_region
      _
    $region17: #{_fused_forward.1} parent=1 // pred_fallthru
      _
    // Predicated region
    $region18: #{_fused_forward.1} parent=1 // pred_check
      _
    $region19: #{_fused_forward.1} parent=1 // pred_check_branch
      %994 = sbr.rel (0) target = $region21
    $region20: #{_fused_forward.1} parent=1 // pred_region
      _
    $region21: #{_fused_forward.1} parent=1 // pred_fallthru
      _
  %995 = vsyncmov [#allocation3]
  %s996 = vpop.sfrf %995
  %p997 = scmp.eq.s32.totalorder %s996, 0
  %p998 = pneg %p997
  %1000 = shalt.err (%p998)

</llo_original>
